<compile_context>
chip_gen: v7x
topology: tpu7x:2x2x1
jax: 0.10.0
libtpu: 0.0.40
codegen_flags: <defaults>
</compile_context>

<pallas_src>
import jax
import jax.numpy as jnp
from jax.experimental import pallas as pl
from jax.experimental.pallas import tpu as pltpu


def _round_up(x, m):
    return (x + m - 1) // m * m


def _distlinear_kernel(x_ref, w_ref, o_ref):
    # x_ref : (bm, indim)  batch tile
    # w_ref : (tn, indim)  pre-scaled, row-normalized weight tile (W = 2*g*v/||v||)
    # o_ref : (bm, tn)
    x = x_ref[...].astype(jnp.float32)

    # Row-wise L2 normalization with the module's +1e-5 added to the *norm*
    # (not the squared norm).  Reciprocal of the (bm,1) norm goes to the EUP.
    s = jnp.sum(x * x, axis=1, keepdims=True)              # (bm, 1)
    inv = pl.reciprocal(jnp.sqrt(s) + 1e-5, approx=True)   # ~1e-3 rel err (EUP)
    x_n = (x * inv).astype(w_ref.dtype)                    # feed MXU in weight dtype

    # NT-form contraction: contract the last dim of both operands; no transpose
    # is materialized before the MXU push.  f32 accumulation.
    cos = jax.lax.dot_general(
        x_n, w_ref[...],
        dimension_numbers=(((1,), (1,)), ((), ())),
        preferred_element_type=jnp.float32,
    )
    o_ref[...] = cos.astype(o_ref.dtype)


def dist_linear(x, weight_v, weight_g, *, bm=None, tn=None, out_dtype=None):
    B, indim = x.shape
    outdim = weight_v.shape[0]
    out_dtype = x.dtype if out_dtype is None else out_dtype

    # Hoisted weight-norm + scale (computed once in the wrapper, fused by XLA):
    #   W_scaled = scale_factor * g * v / ||v||_row   (epsilon-free, like PyTorch).
    v32 = weight_v.astype(jnp.float32)
    g32 = weight_g.astype(jnp.float32).reshape(outdim, 1)
    v_norm = jnp.sqrt(jnp.sum(v32 * v32, axis=1, keepdims=True))
    w_scaled = (2.0 * g32 * v32 / v_norm).astype(weight_v.dtype)

    # Tile choice: batch tile a multiple of 8 (sublane), output tile lane-dense
    # (multiple of 128) whenever outdim allows; both capped so double-buffered
    # tiles stay well inside VMEM on all chips (incl. v7x's 64 MiB).
    if bm is None:
        bm = min(_round_up(B, 8), 256)
    if tn is None:
        tn = min(_round_up(outdim, 128), 256)

    Bp = _round_up(B, bm)
    Np = _round_up(outdim, tn)
    if Bp != B:
        x = jnp.pad(x, ((0, Bp - B), (0, 0)))
    if Np != outdim:
        w_scaled = jnp.pad(w_scaled, ((0, Np - outdim), (0, 0)))

    # TODO(synk): add an indim (K) grid axis + f32 accumulator scratch if indim
    # is ever too large for a single (tile, indim) VMEM block.

    grid = (Bp // bm, Np // tn)
    cost = pl.CostEstimate(
        flops=2 * Bp * indim * Np,
        transcendentals=2 * Bp * (Np // tn),
        bytes_accessed=(
            Bp * indim * jnp.dtype(x.dtype).itemsize
            + Np * indim * jnp.dtype(w_scaled.dtype).itemsize
            + Bp * Np * jnp.dtype(out_dtype).itemsize
        ),
    )

    out = pl.pallas_call(
        _distlinear_kernel,
        out_shape=jax.ShapeDtypeStruct((Bp, Np), out_dtype),
        grid_spec=pltpu.PrefetchScalarGridSpec(
            num_scalar_prefetch=0,
            grid=grid,
            in_specs=[
                pl.BlockSpec((bm, indim), lambda i, j: (i, 0)),   # x tile
                pl.BlockSpec((tn, indim), lambda i, j: (j, 0)),   # W tile
            ],
            out_specs=pl.BlockSpec((bm, tn), lambda i, j: (i, j)),
        ),
        compiler_params=pltpu.CompilerParams(
            dimension_semantics=("parallel", "parallel"),
        ),
        cost_estimate=cost,
    )(x, w_scaled)

    if Bp != B or Np != outdim:
        out = out[:B, :outdim]
    return out


def dist_linear_ref(x, weight_v, weight_g):
    """Pure-JAX reference matching the PyTorch forward."""
    x = x.astype(jnp.float32)
    x_norm = jnp.linalg.norm(x, axis=1, keepdims=True)
    x_n = x / (x_norm + 1e-5)
    v_norm = jnp.linalg.norm(weight_v, axis=1, keepdims=True)
    w = weight_g * weight_v / v_norm
    return 2.0 * (x_n @ w.T)


if __name__ == "__main__":
    # Small shapes consistent with the module: indim=32 features, outdim=16 classes.
    B, indim, outdim = 8, 32, 16

    key = jax.random.PRNGKey(0)
    kx, kv = jax.random.split(key)

    x = jax.random.normal(kx, (B, indim), dtype=jnp.float32)

    # Deterministic parameter init (mimics nn.Linear kaiming-uniform for v,
    # and WeightNorm's g := ||v||_row at application time).
    bound = 1.0 / (indim ** 0.5)
    weight_v = jax.random.uniform(
        kv, (outdim, indim), dtype=jnp.float32, minval=-bound, maxval=bound
    )
    weight_g = jnp.linalg.norm(weight_v, axis=1, keepdims=True)  # (outdim, 1)

    out = dist_linear(x, weight_v, weight_g)
    out = jax.block_until_ready(out)

    ref = dist_linear_ref(x, weight_v, weight_g)
    assert out.shape == (B, outdim)
    # Tolerance accounts for the approx (EUP) reciprocal in the x-normalization.
    assert jnp.allclose(out, ref, atol=5e-3, rtol=5e-3), "mismatch vs reference"

    print("KERNEL_OK")
</pallas_src>

<mosaic_0001>
module attributes {stable_mosaic.version = 11 : i64} {
  func.func @_distlinear_kernel(%arg0: i32, %arg1: i32, %arg2: memref<8x32xf32, #tpu.memory_space<vmem>>, %arg3: memref<128x32xf32, #tpu.memory_space<vmem>>, %arg4: memref<8x128xf32, #tpu.memory_space<vmem>>) attributes {dimension_semantics = [#tpu.dimension_semantics<parallel>, #tpu.dimension_semantics<parallel>], iteration_bounds = array<i64: 1, 1>, scalar_prefetch = 0 : i64, scratch_operands = 0 : i64, tpu.core_type = #tpu.core_type<tc>, window_params = [{transform_indices = @transform_0, window_bounds = array<i64: 8, 32>}, {transform_indices = @transform_1, window_bounds = array<i64: 128, 32>}, {transform_indices = @transform_2, window_bounds = array<i64: 8, 128>}]} {
    %c0 = arith.constant 0 : index
    %c0_0 = arith.constant 0 : index
    %0 = vector.load %arg2[%c0, %c0_0] : memref<8x32xf32, #tpu.memory_space<vmem>>, vector<8x32xf32>
    %1 = arith.mulf %0, %0 : vector<8x32xf32>
    %cst = arith.constant dense<0.000000e+00> : vector<8xf32>
    %2 = vector.multi_reduction <add>, %1, %cst [1] : vector<8x32xf32> to vector<8xf32>
    %3 = vector.shape_cast %2 : vector<8xf32> to vector<8x1xf32>
    %4 = math.sqrt %3 : vector<8x1xf32>
    %cst_1 = arith.constant 9.99999974E-6 : f32
    %5 = vector.broadcast %cst_1 : f32 to vector<8x1xf32>
    %6 = arith.addf %4, %5 : vector<8x1xf32>
    %7 = tpu.reciprocal %6 {approx = true} : vector<8x1xf32> -> vector<8x1xf32>
    %8 = vector.broadcast %7 : vector<8x1xf32> to vector<8x32xf32>
    %9 = arith.mulf %0, %8 : vector<8x32xf32>
    %c0_2 = arith.constant 0 : index
    %c0_3 = arith.constant 0 : index
    %10 = vector.load %arg3[%c0_2, %c0_3] : memref<128x32xf32, #tpu.memory_space<vmem>>, vector<128x32xf32>
    %cst_4 = arith.constant dense<0.000000e+00> : vector<8x128xf32>
    %11 = tpu.matmul %9, %10, %cst_4 {dimension_numbers = #tpu.dot_dimension_numbers<[1], [1], [0], [0], [0, 0, 1, 0], [], []>} : vector<8x32xf32>, vector<128x32xf32>, vector<8x128xf32> -> vector<8x128xf32>
    %c0_5 = arith.constant 0 : index
    %c0_6 = arith.constant 0 : index
    %12 = vector.load %arg4[%c0_5, %c0_6] : memref<8x128xf32, #tpu.memory_space<vmem>>, vector<8x128xf32>
    tpu.vector_store %arg4[%c0_5, %c0_6], %11 {strides = array<i32>} : memref<8x128xf32, #tpu.memory_space<vmem>>, vector<8x128xf32>,
    return
  }
  func.func @transform_0(%arg0: i32, %arg1: i32) -> (i32, i32) {
    %c0_i32 = arith.constant 0 : i32
    %c0_i32_0 = arith.constant 0 : i32
    return %arg0, %c0_i32 : i32, i32
  }
  func.func @transform_1(%arg0: i32, %arg1: i32) -> (i32, i32) {
    %c0_i32 = arith.constant 0 : i32
    %c0_i32_0 = arith.constant 0 : i32
    return %arg1, %c0_i32 : i32, i32
  }
  func.func @transform_2(%arg0: i32, %arg1: i32) -> (i32, i32) {
    %c0_i32 = arith.constant 0 : i32
    return %arg0, %arg1 : i32, i32
  }
}

</mosaic_0001>

<llo_original>
// kernel: tpu_custom_call.1
$region0: #{tpu_custom_call.1}
  #allocation0 [shape = 'u32[]', space=smem, size = 0x4, offset = 0x4, fixed_abs, tag = 'smem constant byte address 0x4 - core index']
  #allocation1 [shape = 'u32[144,128]{1,0:T(1,128)}', space=vmem, size = 0x12000, scoped, tag = 'internal scratch']
  %s0 = inlined_call_operand.vmem [shape: f32[8,32], index: 0, kind: input, shape index: {}]
  %s1 = inlined_call_operand.vmem [shape: f32[128,32], index: 1, kind: input, shape index: {}]
  %s2 = inlined_call_operand.hbm [shape: f32[8,128], index: 2, kind: output, shape index: {}]
  %s3 = sld [smem:[#allocation0]]
  $region18: #{tpu_custom_call.1} parent=0
    _
  %s5 = ssub.s32 1, %s3
  %s6 = scalar_select 0, %s5, %s3
  $region1: #{tpu_custom_call.1} parent=0
    #allocation2 [shape = 'u8[4096]{0}', space=vmem, size = 0x1000, scoped, tag = 'output window, operand 0, single buffered']
    #allocation3 [shape = 's32[1]{0}', space=sflag, size = 0x4, scoped, tag = 'scoped memory for tpu_custom_call.1']
    %7 = vsyncpa [#allocation3], 0
    // Predicated region
    $region2: #{tpu_custom_call.1} parent=1 // pred_check
      _
    $region3: #{tpu_custom_call.1} parent=1 // pred_check_branch
      %9 = sbr.rel (0) target = $region5
    $region4: #{tpu_custom_call.1} parent=1 // pred_region
      _
    $region5: #{tpu_custom_call.1} parent=1 // pred_fallthru
      _
    // Predicated region
    $region6: #{tpu_custom_call.1} parent=1 // pred_check
      _
    $region7: #{tpu_custom_call.1} parent=1 // pred_check_branch
      %11 = sbr.rel (0) target = $region9
    $region8: #{tpu_custom_call.1} parent=1 // pred_region
      _
    $region9: #{tpu_custom_call.1} parent=1 // pred_fallthru
      _
    %v12 = vld [vmem:[%s0] sm:$0xff]
    %v13 = vmul.f32 %v12, %v12
    %vm14 = vcmask 261120
    %v15 = vsel %vm14, %v13, 0.0
    %16 = vadd.xlane.f32.xlu0 %v15
    %v17 = vpop.xlane.xlu0 %16
    %v18 = vrsqrt.pop %v17
    %v19 = vmul.f32 %v17, %v18
    %vm20 = vcmp.eq.f32.partialorder %v17, inf
    %v21 = vsel %vm20, %v17, %v19
    %vm22 = vcmp.eq.f32.partialorder %v17, 0.0
    %v23 = vand.u32 %v17, 2147483648
    %v24 = vsel %vm22, %v23, %v21
    %v25 = vadd.f32 %v24, 1e-05
    %v26 = vrcp.pop %v25
    %v27 = vmul.f32 %v12, %v26
    %v28 = vld [vmem:[%s1] sm:$0xff]
    %v29 = vld [vmem:[%s1 + $0x8] sm:$0xff]
    %v30 = vld [vmem:[%s1 + $0x10] sm:$0xff]
    %v31 = vld [vmem:[%s1 + $0x18] sm:$0xff]
    %v32 = vld [vmem:[%s1 + $0x20] sm:$0xff]
    %v33 = vld [vmem:[%s1 + $0x28] sm:$0xff]
    %v34 = vld [vmem:[%s1 + $0x30] sm:$0xff]
    %v35 = vld [vmem:[%s1 + $0x38] sm:$0xff]
    %v36 = vld [vmem:[%s1 + $0x40] sm:$0xff]
    %v37 = vld [vmem:[%s1 + $0x48] sm:$0xff]
    %v38 = vld [vmem:[%s1 + $0x50] sm:$0xff]
    %v39 = vld [vmem:[%s1 + $0x58] sm:$0xff]
    %v40 = vld [vmem:[%s1 + $0x60] sm:$0xff]
    %v41 = vld [vmem:[%s1 + $0x68] sm:$0xff]
    %v42 = vld [vmem:[%s1 + $0x70] sm:$0xff]
    %v43 = vld [vmem:[%s1 + $0x78] sm:$0xff]
    %v45 = vsel %vm14, %v27, 0
    %v48 = vsel %vm14, %v28, 0
    %v51 = vsel %vm14, %v29, 0
    %v54 = vsel %vm14, %v30, 0
    %v57 = vsel %vm14, %v31, 0
    %v60 = vsel %vm14, %v32, 0
    %v63 = vsel %vm14, %v33, 0
    %v66 = vsel %vm14, %v34, 0
    %v69 = vsel %vm14, %v35, 0
    %v72 = vsel %vm14, %v36, 0
    %v75 = vsel %vm14, %v37, 0
    %v78 = vsel %vm14, %v38, 0
    %v81 = vsel %vm14, %v39, 0
    %v84 = vsel %vm14, %v40, 0
    %v87 = vsel %vm14, %v41, 0
    %v90 = vsel %vm14, %v42, 0
    %v93 = vsel %vm14, %v43, 0
    %95 = vmatprep.subr.mxu0 0.0
    %96 = vmatpush1.xpose.msra.mxu0 %v48
    %97 = vmatprep.subr.mxu0 0.0
    %98 = vmatpush1.xpose.msra.mxu0 %v51
    %99 = vmatprep.subr.mxu0 0.0
    %100 = vmatpush1.xpose.msra.mxu0 %v54
    %101 = vmatprep.subr.mxu0 0.0
    %102 = vmatpush1.xpose.msra.mxu0 %v57
    %103 = vmatprep.subr.mxu0 0.0
    %104 = vmatpush1.xpose.msra.mxu0 %v60
    %105 = vmatprep.subr.mxu0 0.0
    %106 = vmatpush1.xpose.msra.mxu0 %v63
    %107 = vmatprep.subr.mxu0 0.0
    %108 = vmatpush1.xpose.msra.mxu0 %v66
    %109 = vmatprep.subr.mxu0 0.0
    %110 = vmatpush1.xpose.msra.mxu0 %v69
    %111 = vmatprep.subr.mxu0 0.0
    %112 = vmatpush1.xpose.msra.mxu0 %v72
    %113 = vmatprep.subr.mxu0 0.0
    %114 = vmatpush1.xpose.msra.mxu0 %v75
    %115 = vmatprep.subr.mxu0 0.0
    %116 = vmatpush1.xpose.msra.mxu0 %v78
    %117 = vmatprep.subr.mxu0 0.0
    %118 = vmatpush1.xpose.msra.mxu0 %v81
    %119 = vmatprep.subr.mxu0 0.0
    %120 = vmatpush1.xpose.msra.mxu0 %v84
    %121 = vmatprep.subr.mxu0 0.0
    %122 = vmatpush1.xpose.msra.mxu0 %v87
    %123 = vmatprep.subr.mxu0 0.0
    %124 = vmatpush1.xpose.msra.mxu0 %v90
    %125 = vmatprep.subr.mxu0 0.0
    %126 = vmatpush1.xpose.msra.mxu0 %v93
    %127 = vmatprep.subr.mxu0 0.0
    %128 = vmatpush1.xpose.msra.mxu0 0.0
    %129 = vmatprep.subr.mxu0 0.0
    %130 = vmatpush1.xpose.msra.mxu0 0.0
    %131 = vmatprep.subr.mxu0 0.0
    %132 = vmatpush1.xpose.msra.mxu0 0.0
    %133 = vmatprep.subr.mxu0 0.0
    %134 = vmatpush1.xpose.msra.mxu0 0.0
    %135 = vmatprep.subr.mxu0 0.0
    %136 = vmatpush1.xpose.msra.mxu0 0.0
    %137 = vmatprep.subr.mxu0 0.0
    %138 = vmatpush1.xpose.msra.mxu0 0.0
    %139 = vmatprep.subr.mxu0 0.0
    %140 = vmatpush1.xpose.msra.mxu0 0.0
    %141 = vmatprep.subr.mxu0 0.0
    %142 = vmatpush1.xpose.msra.mxu0 0.0
    %143 = vmatprep.subr.mxu0 0.0
    %144 = vmatpush1.xpose.msra.mxu0 0.0
    %145 = vmatprep.subr.mxu0 0.0
    %146 = vmatpush1.xpose.msra.mxu0 0.0
    %147 = vmatprep.subr.mxu0 0.0
    %148 = vmatpush1.xpose.msra.mxu0 0.0
    %149 = vmatprep.subr.mxu0 0.0
    %150 = vmatpush1.xpose.msra.mxu0 0.0
    %151 = vmatprep.subr.mxu0 0.0
    %152 = vmatpush1.xpose.msra.mxu0 0.0
    %153 = vmatprep.subr.mxu0 0.0
    %154 = vmatpush1.xpose.msra.mxu0 0.0
    %155 = vmatprep.subr.mxu0 0.0
    %156 = vmatpush1.xpose.msra.mxu0 0.0
    %157 = vmatprep.subr.mxu0 0.0
    %158 = vmatpush1.xpose.msra.mxu0 0.0
    %159 = vmatprep.mubr.f32.mxu0 0.0
    %160 = vmatmul.mubr.f32.gmra.mrb[0].mxu0 %v45
    %v161 = vpop.f32.mrb[0].mxu0
    %v162 = vadd.f32 0.0, %v161
    %v163 = vpop.f32.mrb[0].mxu0
    %164 = vdwg.mxu0
    %165 = vst [vmem:[#allocation2] sm:$0xff] %v162
    // Predicated region
    $region10: #{tpu_custom_call.1} parent=1 // pred_check
      _
    $region11: #{tpu_custom_call.1} parent=1 // pred_check_branch
      %167 = sbr.rel (0) target = $region13
    $region12: #{tpu_custom_call.1} parent=1 // pred_region
      %s169 = ssub.s32 128, 128
      %170 = vsyncadd [#allocation3], %s169
      %s172 = sshll.u32 [#allocation2], 4
      %s173 = int_to_ptr.vmem [resolvable:$true] %s172
      %175 = dma.vmem_to_hbm [thread:$0]  %s173, 128, %s2, [#allocation3]
    $region13: #{tpu_custom_call.1} parent=1 // pred_fallthru
      _
    // Predicated region
    $region14: #{tpu_custom_call.1} parent=1 // pred_check
      _
    $region15: #{tpu_custom_call.1} parent=1 // pred_check_branch
      %177 = sbr.rel (0) target = $region17
    $region16: #{tpu_custom_call.1} parent=1 // pred_region
      %178 = dma.done [#allocation3], 128
    $region17: #{tpu_custom_call.1} parent=1 // pred_fallthru
      _
    %179 = vsyncpa [#allocation3], 1

</llo_original>
